<compile_context>
chip_gen: v7x
topology: tpu7x:2x2x1
jax: 0.10.0
libtpu: 0.0.40
codegen_flags: <defaults>
</compile_context>

<pallas_src>
import numpy as np
import jax
import jax.numpy as jnp
from jax.experimental import pallas as pl
from jax.experimental.pallas import tpu as pltpu

# Standard JPEG luminance quantization table (transposed, exactly as the
# module-level `y_table` in the reference implementation).
_Y_TABLE = np.array(
    [[16, 11, 10, 16, 24, 40, 51, 61],
     [12, 12, 14, 19, 26, 58, 60, 55],
     [14, 13, 16, 24, 40, 57, 69, 56],
     [14, 17, 22, 29, 51, 87, 80, 62],
     [18, 22, 37, 56, 68, 109, 103, 77],
     [24, 35, 55, 64, 81, 104, 113, 92],
     [49, 64, 78, 87, 103, 121, 120, 101],
     [72, 92, 95, 98, 112, 100, 103, 99]],
    dtype=np.float32).T


def diff_round(x):
    """Differentiable rounding used by DiffJPEG: round(x) + (x - round(x))**3."""
    r = jnp.round(x)
    d = x - r
    return r + d * d * d


# ----------------------------- helpers ------------------------------------

def _sublane(dtype):
    """Minimum sublane multiple for a dtype (8 for 32-bit, 16 for 16-bit, ...)."""
    return max(8, 32 // jnp.dtype(dtype).itemsize)


def _pick_lane(n_elems):
    """Lane width: 128 when possible, else 64 (n_elems is always a mult of 64)."""
    return 128 if n_elems % 128 == 0 else 64


def _pick_tm(rows, block_rows, sub):
    """Row tile: sublane-aligned, <= block_rows, and >=2 grid steps when possible."""
    if rows <= sub:
        return rows                       # full extent; exempt from (8,128) rule
    tm = min(block_rows, -(-rows // 2))   # cap at ceil(rows/2) -> megacore split
    tm = ((tm + sub - 1) // sub) * sub
    return tm


def _inv_table_row(lane, factor):
    """(1, lane) f32 row holding 1/(y_table*factor), tiled with period 64."""
    inv = (np.float32(1.0) / (_Y_TABLE * np.float32(factor))).astype(np.float32)
    return np.tile(inv.reshape(-1), lane // 64).reshape(1, lane)


# ----------------------------- kernels ------------------------------------

def _make_scalar_kernel(rounding):
    def kernel(x_ref, inv_ref, o_ref):
        x = x_ref[...].astype(jnp.float32)          # cast in-VPU (free, mem-bound)
        o_ref[...] = rounding(x * inv_ref[...]).astype(o_ref.dtype)
    return kernel


def _make_batch_kernel(rounding):
    def kernel(x_ref, scale_ref, inv_ref, o_ref):
        x = x_ref[...].astype(jnp.float32)
        # (tm, 1) per-row 1/factor broadcast against the (1, lane) 1/table row.
        o_ref[...] = rounding(x * (scale_ref[...] * inv_ref[...])).astype(o_ref.dtype)
    return kernel


# ----------------------------- wrappers -----------------------------------

def _y_quantize_scalar_factor(image, factor, rounding, block_rows):
    orig_shape = image.shape
    total = int(np.prod(orig_shape))
    lane = _pick_lane(total)
    rows = total // lane
    tm = _pick_tm(rows, block_rows, _sublane(image.dtype))

    x2 = image.reshape(rows, lane)                  # contiguous: no data movement
    inv_row = jnp.asarray(_inv_table_row(lane, factor))

    out2 = pl.pallas_call(
        _make_scalar_kernel(rounding),
        out_shape=jax.ShapeDtypeStruct((rows, lane), jnp.float32),
        grid=(pl.cdiv(rows, tm),),                  # partial last block handled by Pallas
        in_specs=[pl.BlockSpec((tm, lane), lambda i: (i, 0)),
                  pl.BlockSpec((1, lane), lambda i: (0, 0))],
        out_specs=pl.BlockSpec((tm, lane), lambda i: (i, 0)),
        compiler_params=pltpu.CompilerParams(dimension_semantics=("parallel",)),
    )(x2, inv_row)

    return out2.reshape(orig_shape)


def _y_quantize_batch_factor(image, factor, rounding, block_rows):
    orig_shape = image.shape
    B = orig_shape[0]
    factor = jnp.asarray(factor, jnp.float32).reshape(-1)
    assert factor.shape[0] == B, "per-batch factor must have image.shape[0] entries"

    per_b = int(np.prod(orig_shape[1:]))
    lane = _pick_lane(per_b)                        # row boundaries align w/ batches
    rows_b = per_b // lane
    rows = B * rows_b
    tm = _pick_tm(rows, block_rows, _sublane(image.dtype))

    x2 = image.reshape(rows, lane)                  # contiguous: no data movement
    # Per-row 1/factor column: rows*4 bytes (= image bytes / lane) -> negligible.
    scale_col = jnp.repeat(1.0 / factor, rows_b).reshape(rows, 1)
    inv_row = jnp.asarray(_inv_table_row(lane, 1.0))

    out2 = pl.pallas_call(
        _make_batch_kernel(rounding),
        out_shape=jax.ShapeDtypeStruct((rows, lane), jnp.float32),
        grid=(pl.cdiv(rows, tm),),
        in_specs=[pl.BlockSpec((tm, lane), lambda i: (i, 0)),
                  pl.BlockSpec((tm, 1), lambda i: (i, 0)),
                  pl.BlockSpec((1, lane), lambda i: (0, 0))],
        out_specs=pl.BlockSpec((tm, lane), lambda i: (i, 0)),
        compiler_params=pltpu.CompilerParams(dimension_semantics=("parallel",)),
    )(x2, scale_col, inv_row)

    return out2.reshape(orig_shape)


def y_quantize(image, factor=1, *, rounding=diff_round, block_rows=1024):
    """Pallas-TPU equivalent of YQuantize(rounding).forward(image, factor)."""
    image = jnp.asarray(image)                      # keep caller dtype; cast in-kernel
    assert image.shape[-2:] == (8, 8), "YQuantize expects trailing (8, 8) DCT blocks"
    if isinstance(factor, (int, float)):
        return _y_quantize_scalar_factor(image, float(factor), rounding, block_rows)
    return _y_quantize_batch_factor(image, factor, rounding, block_rows)


# ----------------------------- self-test ----------------------------------

if __name__ == "__main__":
    key = jax.random.PRNGKey(0)
    B, L = 2, 16   # batch of 2 images, 16 8x8 DCT blocks each
    image = jax.random.uniform(key, (B, L, 8, 8), dtype=jnp.float32,
                               minval=-128.0, maxval=128.0)
    y = jnp.asarray(_Y_TABLE)

    # --- scalar factor = 1 (common case) ---
    out = jax.block_until_ready(y_quantize(image, factor=1))
    expected = diff_round(image / y)
    assert out.shape == image.shape and out.dtype == jnp.float32
    assert jnp.allclose(out, expected, atol=1e-3, rtol=1e-4)

    # --- scalar factor = 2 ---
    out_f2 = jax.block_until_ready(y_quantize(image, factor=2))
    expected_f2 = diff_round(image / (y * 2.0))
    assert jnp.allclose(out_f2, expected_f2, atol=1e-3, rtol=1e-4)

    # --- per-batch tensor factor ---
    factor = jnp.array([0.5, 2.0], dtype=jnp.float32)
    out2 = jax.block_until_ready(y_quantize(image, factor=factor))
    expected2 = diff_round(image / (y[None, None] * factor[:, None, None, None]))
    assert out2.shape == image.shape
    assert jnp.allclose(out2, expected2, atol=1e-3, rtol=1e-4)

    # --- odd number of 8x8 blocks (lane=64 path, no padding, partial block) ---
    image_odd = jax.random.uniform(jax.random.PRNGKey(1), (1, 3, 8, 8),
                                   dtype=jnp.float32, minval=-128.0, maxval=128.0)
    out3 = jax.block_until_ready(y_quantize(image_odd, factor=1))
    expected3 = diff_round(image_odd / y)
    assert jnp.allclose(out3, expected3, atol=1e-3, rtol=1e-4)

    # --- bf16 input exercises the in-kernel f32 cast ---
    image_bf16 = image.astype(jnp.bfloat16)
    out4 = jax.block_until_ready(y_quantize(image_bf16, factor=1))
    expected4 = diff_round(image_bf16.astype(jnp.float32) / y)
    assert out4.dtype == jnp.float32
    assert jnp.allclose(out4, expected4, atol=1e-2, rtol=1e-2)

    print("KERNEL_OK")
</pallas_src>

<mosaic_0001>
module attributes {stable_mosaic.version = 11 : i64} {
  func.func @kernel(%arg0: i32, %arg1: memref<8x128xf32, #tpu.memory_space<vmem>>, %arg2: memref<1x128xf32, #tpu.memory_space<vmem>>, %arg3: memref<8x128xf32, #tpu.memory_space<vmem>>) attributes {dimension_semantics = [#tpu.dimension_semantics<parallel>], iteration_bounds = array<i64: 2>, scalar_prefetch = 0 : i64, scratch_operands = 0 : i64, tpu.core_type = #tpu.core_type<tc>, window_params = [{transform_indices = @transform_0, window_bounds = array<i64: 8, 128>}, {pipeline_mode = #tpu.pipeline_mode<synchronous>, transform_indices = @transform_1, window_bounds = array<i64: 1, 128>}, {transform_indices = @transform_2, window_bounds = array<i64: 8, 128>}]} {
    %c0 = arith.constant 0 : index
    %c0_0 = arith.constant 0 : index
    %0 = vector.load %arg1[%c0, %c0_0] : memref<8x128xf32, #tpu.memory_space<vmem>>, vector<8x128xf32>
    %c0_1 = arith.constant 0 : index
    %c0_2 = arith.constant 0 : index
    %1 = vector.load %arg2[%c0_1, %c0_2] : memref<1x128xf32, #tpu.memory_space<vmem>>, vector<1x128xf32>
    %2 = vector.broadcast %1 : vector<1x128xf32> to vector<8x128xf32>
    %3 = arith.mulf %0, %2 : vector<8x128xf32>
    %4 = math.roundeven %3 : vector<8x128xf32>
    %5 = arith.subf %3, %4 : vector<8x128xf32>
    %6 = arith.mulf %5, %5 : vector<8x128xf32>
    %7 = arith.mulf %6, %5 : vector<8x128xf32>
    %8 = arith.addf %4, %7 : vector<8x128xf32>
    %c0_3 = arith.constant 0 : index
    %c0_4 = arith.constant 0 : index
    %9 = vector.load %arg3[%c0_3, %c0_4] : memref<8x128xf32, #tpu.memory_space<vmem>>, vector<8x128xf32>
    tpu.vector_store %arg3[%c0_3, %c0_4], %8 {strides = array<i32>} : memref<8x128xf32, #tpu.memory_space<vmem>>, vector<8x128xf32>,
    return
  }
  func.func @transform_0(%arg0: i32) -> (i32, i32) {
    %c0_i32 = arith.constant 0 : i32
    %c0_i32_0 = arith.constant 0 : i32
    return %arg0, %c0_i32 : i32, i32
  }
  func.func @transform_1(%arg0: i32) -> (i32, i32) {
    %c0_i32 = arith.constant 0 : i32
    %c0_i32_0 = arith.constant 0 : i32
    %c0_i32_1 = arith.constant 0 : i32
    return %c0_i32, %c0_i32_0 : i32, i32
  }
  func.func @transform_2(%arg0: i32) -> (i32, i32) {
    %c0_i32 = arith.constant 0 : i32
    %c0_i32_0 = arith.constant 0 : i32
    return %arg0, %c0_i32 : i32, i32
  }
}

</mosaic_0001>

<llo_original>
// kernel: tpu_custom_call.1
$region0: #{tpu_custom_call.1}
  #allocation0 [shape = 'u32[]', space=smem, size = 0x4, offset = 0x4, fixed_abs, tag = 'smem constant byte address 0x4 - core index']
  #allocation1 [shape = 'u32[144,128]{1,0:T(1,128)}', space=vmem, size = 0x12000, scoped, tag = 'internal scratch']
  %s0 = inlined_call_operand.hbm [shape: f32[16,128], index: 0, kind: input, shape index: {}]
  %s1 = inlined_call_operand.vmem [shape: f32[1,128], index: 1, kind: input, shape index: {}]
  %s2 = inlined_call_operand.hbm [shape: f32[16,128], index: 2, kind: output, shape index: {}]
  %s3 = sld [smem:[#allocation0]]
  $region45: #{tpu_custom_call.1} parent=0
    _
  %s5 = ssub.s32 1, %s3
  %s6 = scalar_select 0, %s5, %s3
  $region1: #{tpu_custom_call.1} parent=0
    #allocation2 [shape = 'u8[8192]{0}', space=vmem, size = 0x2000, scoped, tag = 'input window, operand 0']
    #allocation3 [shape = 's32[2]{0}', space=sflag, size = 0x8, scoped, tag = 'scoped memory for tpu_custom_call.1']
    #allocation4 [shape = 's32[2]{0}', space=sflag, size = 0x8, scoped, tag = 'scoped memory for tpu_custom_call.1']
    #allocation5 [shape = 'u8[8192]{0}', space=vmem, size = 0x2000, scoped, tag = 'output window, operand 0']
    %7 = vsyncpa [#allocation3], 0
    %s8 = scalar_lea.sflag [#allocation3], 1
    %9 = vsyncpa %s8, 0
    %10 = vsyncpa [#allocation4], 0
    %s11 = scalar_lea.sflag [#allocation4], 1
    %12 = vsyncpa %s11, 0
    loop: start=0, step=1, limit=4
    $region2: #{tpu_custom_call.1} parent=1 // loop_pre_header
      _
    $region3: #{tpu_custom_call.1} parent=1 // loop_header
      %s14 = sphi 0, %s18
      %p15 = scmp.ge.s32.totalorder %s14, 4
      %s24 = sphi 0, %s26
      %s27 = sphi 0, %s24
      %s28 = sphi 0, %s27
      %s44 = sphi 0, %s28
      %s48 = sphi 0, %s48
      %s50 = sphi 0, %s48
      %s51 = sphi 0, %s50
      %s65 = sphi 0, %s51
      %s71 = sphi 0, %s73
      %s74 = sphi 0, %s71
      %s75 = sphi 0, %s74
      %s91 = sphi 0, %s75
    $region4: #{tpu_custom_call.1} parent=1 // loop_header_branch
      %17 = sbr.rel (%p15) target = $region8
    $region5: #{tpu_custom_call.1} parent=1 // loop_body
      %s19 = ssub.s32 %s14, 1
      %s20 = ssub.s32 %s14, 2
      %s21 = sadd.s32 %s14, 1
      %s22 = ssub.s32 %s14, %s21
      %p23 = scmp.eq.s32.totalorder %s22, 0
      %s25 = sadd.s32 %s24, 1
      %s26 = scalar_select %p23, %s24, %s25
      %p29 = pneg %p23
      %p30 = scmp.eq.s32.totalorder %s14, 1
      %p31 = por %p29, %p30
      %p32 = scmp.ne.s32.totalorder %s24, %s27
      %p33 = scmp.eq.s32.totalorder %s14, 0
      %p34 = por %p32, %p33
      %p35 = scmp.ne.s32.totalorder %s24, %s27
      %p36 = scmp.eq.s32.totalorder %s19, 1
      %p37 = por %p35, %p36
      %p38 = scmp.ne.s32.totalorder %s27, %s28
      %p39 = scmp.eq.s32.totalorder %s19, 0
      %p40 = por %p38, %p39
      %p41 = scmp.ne.s32.totalorder %s27, %s28
      %p42 = scmp.eq.s32.totalorder %s20, 1
      %p43 = por %p41, %p42
      %p45 = scmp.ne.s32.totalorder %s28, %s44
      %p46 = scmp.eq.s32.totalorder %s20, 0
      %p47 = por %p45, %p46
      %s49 = sadd.s32 %s48, 1
      %p52 = scmp.eq.s32.totalorder %s14, 1
      %p53 = scmp.ne.s32.totalorder %s48, %s50
      %p54 = scmp.eq.s32.totalorder %s14, 0
      %p55 = por %p53, %p54
      %p56 = scmp.ne.s32.totalorder %s48, %s50
      %p57 = scmp.eq.s32.totalorder %s19, 1
      %p58 = por %p56, %p57
      %p59 = scmp.ne.s32.totalorder %s50, %s51
      %p60 = scmp.eq.s32.totalorder %s19, 0
      %p61 = por %p59, %p60
      %p62 = scmp.ne.s32.totalorder %s50, %s51
      %p63 = scmp.eq.s32.totalorder %s20, 1
      %p64 = por %p62, %p63
      %p66 = scmp.ne.s32.totalorder %s51, %s65
      %p67 = scmp.eq.s32.totalorder %s20, 0
      %p68 = por %p66, %p67
      %s69 = ssub.s32 %s14, %s21
      %p70 = scmp.eq.s32.totalorder %s69, 0
      %s72 = sadd.s32 %s71, 1
      %s73 = scalar_select %p70, %s71, %s72
      %p76 = pneg %p70
      %p77 = scmp.eq.s32.totalorder %s14, 1
      %p78 = por %p76, %p77
      %p79 = scmp.ne.s32.totalorder %s71, %s74
      %p80 = scmp.eq.s32.totalorder %s14, 0
      %p81 = por %p79, %p80
      %p82 = scmp.ne.s32.totalorder %s71, %s74
      %p83 = scmp.eq.s32.totalorder %s19, 1
      %p84 = por %p82, %p83
      %p85 = scmp.ne.s32.totalorder %s74, %s75
      %p86 = scmp.eq.s32.totalorder %s19, 0
      %p87 = por %p85, %p86
      %p88 = scmp.ne.s32.totalorder %s74, %s75
      %p89 = scmp.eq.s32.totalorder %s20, 1
      %p90 = por %p88, %p89
      %p92 = scmp.ne.s32.totalorder %s75, %s91
      %p93 = scmp.eq.s32.totalorder %s20, 0
      %p94 = por %p92, %p93
      %p95 = scmp.le.s32.totalorder 1, %s14
      %p96 = scmp.lt.s32.totalorder %s14, 3
      %p97 = pnand %p95, %p96
      %p98 = pneg %p97
      // Predicated region
      $region9: #{tpu_custom_call.1} parent=5 // pred_check
        _
      $region10: #{tpu_custom_call.1} parent=5 // pred_check_branch
        %100 = sbr.rel (%p97) target = $region12
      $region11: #{tpu_custom_call.1} parent=5 // pred_region
        %s101 = ssub.s32 %s14, 1
        // Predicated region
        $region13: #{tpu_custom_call.1} parent=11 // pred_check
          %p102 = pneg %p61
        $region14: #{tpu_custom_call.1} parent=11 // pred_check_branch
          %104 = sbr.rel (%p102) target = $region16
        $region15: #{tpu_custom_call.1} parent=11 // pred_region
          _
        $region16: #{tpu_custom_call.1} parent=11 // pred_fallthru
          _
      $region12: #{tpu_custom_call.1} parent=5 // pred_fallthru
        _
      %p105 = scmp.lt.s32.totalorder %s14, 2
      // Predicated region
      $region17: #{tpu_custom_call.1} parent=5 // pred_check
        %p106 = pneg %p105
      $region18: #{tpu_custom_call.1} parent=5 // pred_check_branch
        %108 = sbr.rel (%p106) target = $region20
      $region19: #{tpu_custom_call.1} parent=5 // pred_region
        // Predicated region
        $region21: #{tpu_custom_call.1} parent=19 // pred_check
          %p109 = pneg %p34
        $region22: #{tpu_custom_call.1} parent=19 // pred_check_branch
          %111 = sbr.rel (%p109) target = $region24
        $region23: #{tpu_custom_call.1} parent=19 // pred_region
          %s112 = sand.u32 %s24, 1
          %s113 = scalar_lea.sflag [#allocation3], %s112
          %s114 = sand.u32 %s24, 1
          %s115 = smul.addr %s114, 8
          %s116 = scalar_lea.vmem [#allocation2], %s115
          %s118 = ssub.s32 128, 128
          %119 = vsyncadd %s113, %s118
          %s120 = smul.addr %s14, 128
          %s121 = scalar_lea.hbm %s0, %s120
          %s123 = sshll.u32 %s116, 4
          %s124 = int_to_ptr.vmem [resolvable:$true] %s123
          %126 = dma.hbm_to_vmem [thread:$0]  %s121, 128, %s124, %s113
        $region24: #{tpu_custom_call.1} parent=19 // pred_fallthru
          _
      $region20: #{tpu_custom_call.1} parent=5 // pred_fallthru
        _
      %p127 = scmp.le.s32.totalorder 1, %s14
      %p128 = scmp.lt.s32.totalorder %s14, 3
      %p129 = pnand %p127, %p128
      %p130 = pneg %p129
      // Predicated region
      $region25: #{tpu_custom_call.1} parent=5 // pred_check
        _
      $region26: #{tpu_custom_call.1} parent=5 // pred_check_branch
        %132 = sbr.rel (%p129) target = $region28
      $region27: #{tpu_custom_call.1} parent=5 // pred_region
        %s133 = ssub.s32 %s14, 1
        %s134 = sand.u32 %s27, 1
        %s135 = scalar_lea.sflag [#allocation3], %s134
        %s136 = sand.u32 %s27, 1
        %s137 = smul.addr %s136, 8
        %s138 = scalar_lea.vmem [#allocation2], %s137
        // Predicated region
        $region29: #{tpu_custom_call.1} parent=27 // pred_check
          %p139 = pneg %p40
        $region30: #{tpu_custom_call.1} parent=27 // pred_check_branch
          %141 = sbr.rel (%p139) target = $region32
        $region31: #{tpu_custom_call.1} parent=27 // pred_region
          %142 = dma.done %s135, 128
        $region32: #{tpu_custom_call.1} parent=27 // pred_fallthru
          _
        %s143 = sand.u32 %s27, 1
        %s144 = scalar_lea.sflag [#allocation3], %s143
        %s145 = sand.u32 %s27, 1
        %s146 = smul.addr %s145, 8
        %s147 = scalar_lea.vmem [#allocation2], %s146
        %p148 = pneg %p40
        %p149 = pneg %p37
        %p150 = pneg %p61
        %p151 = pneg %p58
        %p152 = pneg %p87
        %p153 = pneg %p84
        %s154 = sand.u32 %s74, 1
        %s155 = scalar_lea.sflag [#allocation4], %s154
        %s156 = sand.u32 %s74, 1
        %s157 = smul.addr %s156, 8
        %s158 = scalar_lea.vmem [#allocation5], %s157
        %v159 = vld [vmem:[%s138] sm:$0xff]
        %v160 = vld [vmem:[%s1] sm:$0x1]
        %v162 = vlaneseq
        %v163 = vshrl.u32 %v162, 7
        %v164 = vsub.s32 0, %v163
        %v165 = vrot.slane %v160, %v164
        %v167 = vmul.f32 %v159, %v165
        %v168 = vround.ne.pseudo %v167
        %v169 = vsub.f32 %v167, %v168
        %v170 = vmul.f32 %v169, %v169
        %v171 = vmul.f32 %v170, %v169
        %v172 = vadd.f32 %v168, %v171
        %173 = vst [vmem:[%s158] sm:$0xff] %v172
        %s174 = sand.u32 %s74, 1
        %s175 = scalar_lea.sflag [#allocation4], %s174
        %s176 = sand.u32 %s74, 1
        %s177 = smul.addr %s176, 8
        %s178 = scalar_lea.vmem [#allocation5], %s177
        // Predicated region
        $region33: #{tpu_custom_call.1} parent=27 // pred_check
          %p179 = pneg %p84
        $region34: #{tpu_custom_call.1} parent=27 // pred_check_branch
          %181 = sbr.rel (%p179) target = $region36
        $region35: #{tpu_custom_call.1} parent=27 // pred_region
          %s183 = ssub.s32 128, 128
          %184 = vsyncadd %s175, %s183
          %s185 = smul.addr %s19, 128
          %s186 = scalar_lea.hbm %s2, %s185
          %s188 = sshll.u32 %s178, 4
          %s189 = int_to_ptr.vmem [resolvable:$true] %s188
          %191 = dma.vmem_to_hbm [thread:$0]  %s189, 128, %s186, %s175
        $region36: #{tpu_custom_call.1} parent=27 // pred_fallthru
          _
      $region28: #{tpu_custom_call.1} parent=5 // pred_fallthru
        _
      %p192 = scmp.le.s32.totalorder 2, %s14
      // Predicated region
      $region37: #{tpu_custom_call.1} parent=5 // pred_check
        %p193 = pneg %p192
      $region38: #{tpu_custom_call.1} parent=5 // pred_check_branch
        %195 = sbr.rel (%p193) target = $region40
      $region39: #{tpu_custom_call.1} parent=5 // pred_region
        %s196 = ssub.s32 %s14, 2
        // Predicated region
        $region41: #{tpu_custom_call.1} parent=39 // pred_check
          %p197 = pneg %p90
        $region42: #{tpu_custom_call.1} parent=39 // pred_check_branch
          %199 = sbr.rel (%p197) target = $region44
        $region43: #{tpu_custom_call.1} parent=39 // pred_region
          %s200 = sand.u32 %s75, 1
          %s201 = scalar_lea.sflag [#allocation4], %s200
          %s202 = sand.u32 %s75, 1
          %s203 = smul.addr %s202, 8
          %s204 = scalar_lea.vmem [#allocation5], %s203
          %205 = dma.done %s201, 128
        $region44: #{tpu_custom_call.1} parent=39 // pred_fallthru
          _
      $region40: #{tpu_custom_call.1} parent=5 // pred_fallthru
        _
    $region6: #{tpu_custom_call.1} parent=1 // loop_footer
      %s18 = sadd.s32 1, %s14
    $region7: #{tpu_custom_call.1} parent=1 // loop_footer_branch
      %13 = sbr.rel target = $region3
    $region8: #{tpu_custom_call.1} parent=1 // loop_exit
      _
    %206 = vsyncpa [#allocation3], 1
    %s207 = scalar_lea.sflag [#allocation3], 1
    %208 = vsyncpa %s207, 1
    %209 = vsyncpa [#allocation4], 1
    %s210 = scalar_lea.sflag [#allocation4], 1
    %211 = vsyncpa %s210, 1

</llo_original>
